<compile_context>
chip_gen: v5e
topology: v5e:2x2
jax: 0.10.0
libtpu: 0.0.40
codegen_flags: <defaults>
</compile_context>

<pallas_src>
from functools import partial

import jax
import jax.numpy as jnp
from jax.experimental import pallas as pl
from jax.experimental.pallas import tpu as pltpu

LANE = 128


def _policy_kernel(x_ref, w1_ref, b1_ref, w2_ref, b2_ref, w3_ref, b3_ref,
                   out_ref, *, action_bound):
    # x_ref : [Bt, S]        (f32)
    # w1_ref: [S,  H1p]      (bf16)   b1_ref: [1, H1p] (f32)
    # w2_ref: [H1p, H2p]     (bf16)   b2_ref: [1, H2p] (f32)
    # w3_ref: [H2p, Ap]      (bf16)   b3_ref: [1, Ap]  (f32)
    # out_ref:[Bt, Ap]       (f32)
    x = x_ref[...]

    h1 = jnp.dot(x.astype(jnp.bfloat16), w1_ref[...],
                 preferred_element_type=jnp.float32)
    h1 = jnp.maximum(h1 + b1_ref[...], 0.0)

    h2 = jnp.dot(h1.astype(jnp.bfloat16), w2_ref[...],
                 preferred_element_type=jnp.float32)
    h2 = jnp.maximum(h2 + b2_ref[...], 0.0)

    z = jnp.dot(h2.astype(jnp.bfloat16), w3_ref[...],
                preferred_element_type=jnp.float32)
    z = z + b3_ref[...]

    out_ref[...] = (jnp.tanh(z) * action_bound).astype(out_ref.dtype)


def policy_forward(x, kernel_params, action_dim, action_bound, *,
                   batch_block=256):
    """Fused PolicyNet forward on padded (lane-dense) parameters."""
    w1, b1, w2, b2, w3, b3 = kernel_params
    B, S = x.shape
    a_pad = w3.shape[1]

    # Pad batch up to a multiple of the batch tile (padded rows are sliced off).
    n_blocks = pl.cdiv(B, batch_block)
    Bp = n_blocks * batch_block
    if Bp != B:
        x = jnp.pad(x, ((0, Bp - B), (0, 0)))

    resident = lambda arr: pl.BlockSpec(arr.shape, lambda i: (0, 0))

    out = pl.pallas_call(
        partial(_policy_kernel, action_bound=action_bound),
        out_shape=jax.ShapeDtypeStruct((Bp, a_pad), jnp.float32),
        grid_spec=pltpu.PrefetchScalarGridSpec(
            num_scalar_prefetch=0,
            grid=(n_blocks,),
            in_specs=[
                pl.BlockSpec((batch_block, S), lambda i: (i, 0)),
                resident(w1), resident(b1),
                resident(w2), resident(b2),
                resident(w3), resident(b3),
            ],
            out_specs=pl.BlockSpec((batch_block, a_pad), lambda i: (i, 0)),
        ),
        compiler_params=pltpu.CompilerParams(
            dimension_semantics=("parallel",)),
    )(x, w1, b1, w2, b2, w3, b3)

    return out[:B, :action_dim]


def init_params(key, state_dim, hidden_dim_1, hidden_dim_2, action_dim):
    """f32 params (weights stored [in, out]) mirroring the PyTorch init ranges."""
    k1, k2, k3, k4, k5, k6 = jax.random.split(key, 6)
    b1r = 1.0 / (state_dim ** 0.5)
    b2r = 1.0 / (hidden_dim_1 ** 0.5)
    b3r = 0.003
    w1 = jax.random.uniform(k1, (state_dim, hidden_dim_1), jnp.float32, -b1r, b1r)
    b1 = jax.random.uniform(k2, (1, hidden_dim_1), jnp.float32, -b1r, b1r)
    w2 = jax.random.uniform(k3, (hidden_dim_1, hidden_dim_2), jnp.float32, -b2r, b2r)
    b2 = jax.random.uniform(k4, (1, hidden_dim_2), jnp.float32, -b2r, b2r)
    w3 = jax.random.uniform(k5, (hidden_dim_2, action_dim), jnp.float32, -b3r, b3r)
    b3 = jax.random.uniform(k6, (1, action_dim), jnp.float32, -b3r, b3r)
    return (w1, b1, w2, b2, w3, b3)


def prepare_kernel_params(params, lane=LANE):
    """Zero-pad feature dims to the lane width; weights -> bf16, biases stay f32."""
    w1, b1, w2, b2, w3, b3 = params
    s, h1 = w1.shape
    _, h2 = w2.shape
    _, a = w3.shape
    rup = lambda n: ((n + lane - 1) // lane) * lane
    h1p, h2p, ap = rup(h1), rup(h2), rup(a)

    pad2 = lambda m, r, c: jnp.pad(m, ((0, r - m.shape[0]), (0, c - m.shape[1])))
    w1p = pad2(w1, s, h1p).astype(jnp.bfloat16)
    b1p = pad2(b1, 1, h1p)
    w2p = pad2(w2, h1p, h2p).astype(jnp.bfloat16)
    b2p = pad2(b2, 1, h2p)
    w3p = pad2(w3, h2p, ap).astype(jnp.bfloat16)
    b3p = pad2(b3, 1, ap)
    return (w1p, b1p, w2p, b2p, w3p, b3p)


def reference_forward_f32(x, params, action_bound):
    """Pure-f32 JAX reference (module semantics)."""
    w1, b1, w2, b2, w3, b3 = params
    h1 = jnp.maximum(x @ w1 + b1, 0.0)
    h2 = jnp.maximum(h1 @ w2 + b2, 0.0)
    return jnp.tanh(h2 @ w3 + b3) * action_bound


def reference_forward_bf16(x, params, action_bound):
    """Reference with the same bf16-in / f32-accumulate casts as the kernel."""
    w1, b1, w2, b2, w3, b3 = params
    dot = lambda a, b: jnp.dot(a.astype(jnp.bfloat16), b.astype(jnp.bfloat16),
                               preferred_element_type=jnp.float32)
    h1 = jnp.maximum(dot(x, w1) + b1, 0.0)
    h2 = jnp.maximum(dot(h1, w2) + b2, 0.0)
    return jnp.tanh(dot(h2, w3) + b3) * action_bound


if __name__ == "__main__":
    state_dim, action_dim = 12, 4
    hidden_dim_1, hidden_dim_2 = 32, 32
    action_bound = 2.0
    batch = 512            # 2 grid steps of 256 rows each

    key = jax.random.PRNGKey(0)
    kx, kp = jax.random.split(key)

    x = jax.random.normal(kx, (batch, state_dim), jnp.float32)
    params = init_params(kp, state_dim, hidden_dim_1, hidden_dim_2, action_dim)
    kparams = prepare_kernel_params(params)

    y = policy_forward(x, kparams, action_dim, action_bound, batch_block=256)
    y = jax.block_until_ready(y)

    assert y.shape == (batch, action_dim), y.shape

    # Tight check against a reference with identical bf16/f32 casting.
    y_ref_bf16 = reference_forward_bf16(x, params, action_bound)
    assert jnp.allclose(y, y_ref_bf16, atol=1e-4, rtol=1e-4), (
        float(jnp.max(jnp.abs(y - y_ref_bf16))))

    # Looser check against the pure-f32 module semantics (bf16 weight rounding).
    y_ref_f32 = reference_forward_f32(x, params, action_bound)
    assert jnp.allclose(y, y_ref_f32, atol=5e-2, rtol=5e-2), (
        float(jnp.max(jnp.abs(y - y_ref_f32))))

    print("KERNEL_OK")
</pallas_src>

<mosaic_0001>
module attributes {stable_mosaic.version = 11 : i64} {
  func.func @_policy_kernel(%arg0: i32, %arg1: memref<256x12xf32, #tpu.memory_space<vmem>>, %arg2: memref<12x128xbf16, #tpu.memory_space<vmem>>, %arg3: memref<1x128xf32, #tpu.memory_space<vmem>>, %arg4: memref<128x128xbf16, #tpu.memory_space<vmem>>, %arg5: memref<1x128xf32, #tpu.memory_space<vmem>>, %arg6: memref<128x128xbf16, #tpu.memory_space<vmem>>, %arg7: memref<1x128xf32, #tpu.memory_space<vmem>>, %arg8: memref<256x128xf32, #tpu.memory_space<vmem>>) attributes {dimension_semantics = [#tpu.dimension_semantics<parallel>], iteration_bounds = array<i64: 2>, scalar_prefetch = 0 : i64, scratch_operands = 0 : i64, tpu.core_type = #tpu.core_type<tc>, window_params = [{transform_indices = @transform_0, window_bounds = array<i64: 256, 12>}, {pipeline_mode = #tpu.pipeline_mode<synchronous>, transform_indices = @transform_1, window_bounds = array<i64: 12, 128>}, {pipeline_mode = #tpu.pipeline_mode<synchronous>, transform_indices = @transform_2, window_bounds = array<i64: 1, 128>}, {pipeline_mode = #tpu.pipeline_mode<synchronous>, transform_indices = @transform_3, window_bounds = array<i64: 128, 128>}, {pipeline_mode = #tpu.pipeline_mode<synchronous>, transform_indices = @transform_4, window_bounds = array<i64: 1, 128>}, {pipeline_mode = #tpu.pipeline_mode<synchronous>, transform_indices = @transform_5, window_bounds = array<i64: 128, 128>}, {pipeline_mode = #tpu.pipeline_mode<synchronous>, transform_indices = @transform_6, window_bounds = array<i64: 1, 128>}, {transform_indices = @transform_7, window_bounds = array<i64: 256, 128>}]} {
    %c0 = arith.constant 0 : index
    %c0_0 = arith.constant 0 : index
    %0 = vector.load %arg1[%c0, %c0_0] : memref<256x12xf32, #tpu.memory_space<vmem>>, vector<256x12xf32>
    %1 = arith.truncf %0 : vector<256x12xf32> to vector<256x12xbf16>
    %c0_1 = arith.constant 0 : index
    %c0_2 = arith.constant 0 : index
    %2 = vector.load %arg2[%c0_1, %c0_2] : memref<12x128xbf16, #tpu.memory_space<vmem>>, vector<12x128xbf16>
    %cst = arith.constant dense<0.000000e+00> : vector<256x128xf32>
    %3 = tpu.matmul %1, %2, %cst {dimension_numbers = #tpu.dot_dimension_numbers<[1], [0], [0], [1], [0, 0, 1, 1], [], []>} : vector<256x12xbf16>, vector<12x128xbf16>, vector<256x128xf32> -> vector<256x128xf32>
    %c0_3 = arith.constant 0 : index
    %c0_4 = arith.constant 0 : index
    %4 = vector.load %arg3[%c0_3, %c0_4] : memref<1x128xf32, #tpu.memory_space<vmem>>, vector<1x128xf32>
    %5 = vector.broadcast %4 : vector<1x128xf32> to vector<256x128xf32>
    %6 = arith.addf %3, %5 : vector<256x128xf32>
    %cst_5 = arith.constant 0.000000e+00 : f32
    %7 = vector.broadcast %cst_5 : f32 to vector<256x128xf32>
    %8 = arith.maximumf %6, %7 : vector<256x128xf32>
    %9 = arith.truncf %8 : vector<256x128xf32> to vector<256x128xbf16>
    %c0_6 = arith.constant 0 : index
    %c0_7 = arith.constant 0 : index
    %10 = vector.load %arg4[%c0_6, %c0_7] : memref<128x128xbf16, #tpu.memory_space<vmem>>, vector<128x128xbf16>
    %cst_8 = arith.constant dense<0.000000e+00> : vector<256x128xf32>
    %11 = tpu.matmul %9, %10, %cst_8 {dimension_numbers = #tpu.dot_dimension_numbers<[1], [0], [0], [1], [0, 0, 1, 1], [], []>} : vector<256x128xbf16>, vector<128x128xbf16>, vector<256x128xf32> -> vector<256x128xf32>
    %c0_9 = arith.constant 0 : index
    %c0_10 = arith.constant 0 : index
    %12 = vector.load %arg5[%c0_9, %c0_10] : memref<1x128xf32, #tpu.memory_space<vmem>>, vector<1x128xf32>
    %13 = vector.broadcast %12 : vector<1x128xf32> to vector<256x128xf32>
    %14 = arith.addf %11, %13 : vector<256x128xf32>
    %cst_11 = arith.constant 0.000000e+00 : f32
    %15 = vector.broadcast %cst_11 : f32 to vector<256x128xf32>
    %16 = arith.maximumf %14, %15 : vector<256x128xf32>
    %17 = arith.truncf %16 : vector<256x128xf32> to vector<256x128xbf16>
    %c0_12 = arith.constant 0 : index
    %c0_13 = arith.constant 0 : index
    %18 = vector.load %arg6[%c0_12, %c0_13] : memref<128x128xbf16, #tpu.memory_space<vmem>>, vector<128x128xbf16>
    %cst_14 = arith.constant dense<0.000000e+00> : vector<256x128xf32>
    %19 = tpu.matmul %17, %18, %cst_14 {dimension_numbers = #tpu.dot_dimension_numbers<[1], [0], [0], [1], [0, 0, 1, 1], [], []>} : vector<256x128xbf16>, vector<128x128xbf16>, vector<256x128xf32> -> vector<256x128xf32>
    %c0_15 = arith.constant 0 : index
    %c0_16 = arith.constant 0 : index
    %20 = vector.load %arg7[%c0_15, %c0_16] : memref<1x128xf32, #tpu.memory_space<vmem>>, vector<1x128xf32>
    %21 = vector.broadcast %20 : vector<1x128xf32> to vector<256x128xf32>
    %22 = arith.addf %19, %21 : vector<256x128xf32>
    %23 = math.tanh %22 : vector<256x128xf32>
    %cst_17 = arith.constant 2.000000e+00 : f32
    %24 = vector.broadcast %cst_17 : f32 to vector<256x128xf32>
    %25 = arith.mulf %23, %24 : vector<256x128xf32>
    %c0_18 = arith.constant 0 : index
    %c0_19 = arith.constant 0 : index
    %26 = vector.load %arg8[%c0_18, %c0_19] : memref<256x128xf32, #tpu.memory_space<vmem>>, vector<256x128xf32>
    tpu.vector_store %arg8[%c0_18, %c0_19], %25 {strides = array<i32>} : memref<256x128xf32, #tpu.memory_space<vmem>>, vector<256x128xf32>,
    return
  }
  func.func @transform_0(%arg0: i32) -> (i32, i32) {
    %c0_i32 = arith.constant 0 : i32
    %c0_i32_0 = arith.constant 0 : i32
    return %arg0, %c0_i32 : i32, i32
  }
  func.func @transform_1(%arg0: i32) -> (i32, i32) {
    %c0_i32 = arith.constant 0 : i32
    %c0_i32_0 = arith.constant 0 : i32
    %c0_i32_1 = arith.constant 0 : i32
    return %c0_i32, %c0_i32_0 : i32, i32
  }
  func.func @transform_2(%arg0: i32) -> (i32, i32) {
    %c0_i32 = arith.constant 0 : i32
    %c0_i32_0 = arith.constant 0 : i32
    %c0_i32_1 = arith.constant 0 : i32
    return %c0_i32, %c0_i32_0 : i32, i32
  }
  func.func @transform_3(%arg0: i32) -> (i32, i32) {
    %c0_i32 = arith.constant 0 : i32
    %c0_i32_0 = arith.constant 0 : i32
    %c0_i32_1 = arith.constant 0 : i32
    return %c0_i32, %c0_i32_0 : i32, i32
  }
  func.func @transform_4(%arg0: i32) -> (i32, i32) {
    %c0_i32 = arith.constant 0 : i32
    %c0_i32_0 = arith.constant 0 : i32
    %c0_i32_1 = arith.constant 0 : i32
    return %c0_i32, %c0_i32_0 : i32, i32
  }
  func.func @transform_5(%arg0: i32) -> (i32, i32) {
    %c0_i32 = arith.constant 0 : i32
    %c0_i32_0 = arith.constant 0 : i32
    %c0_i32_1 = arith.constant 0 : i32
    return %c0_i32, %c0_i32_0 : i32, i32
  }
  func.func @transform_6(%arg0: i32) -> (i32, i32) {
    %c0_i32 = arith.constant 0 : i32
    %c0_i32_0 = arith.constant 0 : i32
    %c0_i32_1 = arith.constant 0 : i32
    return %c0_i32, %c0_i32_0 : i32, i32
  }
  func.func @transform_7(%arg0: i32) -> (i32, i32) {
    %c0_i32 = arith.constant 0 : i32
    %c0_i32_0 = arith.constant 0 : i32
    return %arg0, %c0_i32 : i32, i32
  }
}

</mosaic_0001>

<llo_original>
// kernel: tpu_custom_call.1
$region0: #{tpu_custom_call.1}
  #allocation0 [shape = 'u32[]', space=smem, size = 0x4, offset = 0x4, fixed_abs, tag = 'smem constant byte address 0x4 - core index']
  #allocation1 [shape = 'u32[72,128]{1,0:T(1,128)}', space=vmem, size = 0x9000, scoped, tag = 'internal scratch']
  %s0 = inlined_call_operand.vmem [shape: f32[512,12], index: 0, kind: input, shape index: {}]
  %s1 = inlined_call_operand.vmem [shape: bf16[12,128], index: 1, kind: input, shape index: {}]
  %s2 = inlined_call_operand.vmem [shape: f32[1,128], index: 2, kind: input, shape index: {}]
  %s3 = inlined_call_operand.vmem [shape: bf16[128,128], index: 3, kind: input, shape index: {}]
  %s4 = inlined_call_operand.vmem [shape: f32[1,128], index: 4, kind: input, shape index: {}]
  %s5 = inlined_call_operand.vmem [shape: bf16[128,128], index: 5, kind: input, shape index: {}]
  %s6 = inlined_call_operand.vmem [shape: f32[1,128], index: 6, kind: input, shape index: {}]
  %s7 = inlined_call_operand.hbm [shape: f32[512,128], index: 7, kind: output, shape index: {}]
  %s8 = sld [smem:[#allocation0]]
  $region61: #{tpu_custom_call.1} parent=0
    _
  %s10 = ssub.s32 1, %s8
  %s11 = scalar_select 0, %s10, %s8
  $region1: #{tpu_custom_call.1} parent=0
    #allocation2 [shape = 'u8[262144]{0}', space=vmem, size = 0x40000, scoped, tag = 'output window, operand 0']
    #allocation3 [shape = 's32[2]{0}', space=sflag, size = 0x8, scoped, tag = 'scoped memory for tpu_custom_call.1']
    %12 = vsyncpa [#allocation3], 0
    %s13 = scalar_lea.sflag [#allocation3], 1
    %14 = vsyncpa %s13, 0
    loop: start=0, step=1, limit=4
    $region2: #{tpu_custom_call.1} parent=1 // loop_pre_header
      _
    $region3: #{tpu_custom_call.1} parent=1 // loop_header
      %s16 = sphi 0, %s20
      %p17 = scmp.ge.s32.totalorder %s16, 4
      %s26 = sphi 0, %s28
      %s29 = sphi 0, %s26
      %s30 = sphi 0, %s29
      %s46 = sphi 0, %s30
      %s50 = sphi 0, %s50
      %s52 = sphi 0, %s50
      %s53 = sphi 0, %s52
      %s67 = sphi 0, %s53
      %s71 = sphi 0, %s71
      %s73 = sphi 0, %s71
      %s74 = sphi 0, %s73
      %s88 = sphi 0, %s74
      %s92 = sphi 0, %s92
      %s94 = sphi 0, %s92
      %s95 = sphi 0, %s94
      %s109 = sphi 0, %s95
      %s113 = sphi 0, %s113
      %s115 = sphi 0, %s113
      %s116 = sphi 0, %s115
      %s130 = sphi 0, %s116
      %s134 = sphi 0, %s134
      %s136 = sphi 0, %s134
      %s137 = sphi 0, %s136
      %s151 = sphi 0, %s137
      %s155 = sphi 0, %s155
      %s157 = sphi 0, %s155
      %s158 = sphi 0, %s157
      %s172 = sphi 0, %s158
      %s178 = sphi 0, %s180
      %s181 = sphi 0, %s178
      %s182 = sphi 0, %s181
      %s198 = sphi 0, %s182
    $region4: #{tpu_custom_call.1} parent=1 // loop_header_branch
      %19 = sbr.rel (%p17) target = $region8
    $region5: #{tpu_custom_call.1} parent=1 // loop_body
      %s21 = ssub.s32 %s16, 1
      %s22 = ssub.s32 %s16, 2
      %s23 = sadd.s32 %s16, 1
      %s24 = ssub.s32 %s16, %s23
      %p25 = scmp.eq.s32.totalorder %s24, 0
      %s27 = sadd.s32 %s26, 1
      %s28 = scalar_select %p25, %s26, %s27
      %p31 = pneg %p25
      %p32 = scmp.eq.s32.totalorder %s16, 1
      %p33 = por %p31, %p32
      %p34 = scmp.ne.s32.totalorder %s26, %s29
      %p35 = scmp.eq.s32.totalorder %s16, 0
      %p36 = por %p34, %p35
      %p37 = scmp.ne.s32.totalorder %s26, %s29
      %p38 = scmp.eq.s32.totalorder %s21, 1
      %p39 = por %p37, %p38
      %p40 = scmp.ne.s32.totalorder %s29, %s30
      %p41 = scmp.eq.s32.totalorder %s21, 0
      %p42 = por %p40, %p41
      %p43 = scmp.ne.s32.totalorder %s29, %s30
      %p44 = scmp.eq.s32.totalorder %s22, 1
      %p45 = por %p43, %p44
      %p47 = scmp.ne.s32.totalorder %s30, %s46
      %p48 = scmp.eq.s32.totalorder %s22, 0
      %p49 = por %p47, %p48
      %s51 = sadd.s32 %s50, 1
      %p54 = scmp.eq.s32.totalorder %s16, 1
      %p55 = scmp.ne.s32.totalorder %s50, %s52
      %p56 = scmp.eq.s32.totalorder %s16, 0
      %p57 = por %p55, %p56
      %p58 = scmp.ne.s32.totalorder %s50, %s52
      %p59 = scmp.eq.s32.totalorder %s21, 1
      %p60 = por %p58, %p59
      %p61 = scmp.ne.s32.totalorder %s52, %s53
      %p62 = scmp.eq.s32.totalorder %s21, 0
      %p63 = por %p61, %p62
      %p64 = scmp.ne.s32.totalorder %s52, %s53
      %p65 = scmp.eq.s32.totalorder %s22, 1
      %p66 = por %p64, %p65
      %p68 = scmp.ne.s32.totalorder %s53, %s67
      %p69 = scmp.eq.s32.totalorder %s22, 0
      %p70 = por %p68, %p69
      %s72 = sadd.s32 %s71, 1
      %p75 = scmp.eq.s32.totalorder %s16, 1
      %p76 = scmp.ne.s32.totalorder %s71, %s73
      %p77 = scmp.eq.s32.totalorder %s16, 0
      %p78 = por %p76, %p77
      %p79 = scmp.ne.s32.totalorder %s71, %s73
      %p80 = scmp.eq.s32.totalorder %s21, 1
      %p81 = por %p79, %p80
      %p82 = scmp.ne.s32.totalorder %s73, %s74
      %p83 = scmp.eq.s32.totalorder %s21, 0
      %p84 = por %p82, %p83
      %p85 = scmp.ne.s32.totalorder %s73, %s74
      %p86 = scmp.eq.s32.totalorder %s22, 1
      %p87 = por %p85, %p86
      %p89 = scmp.ne.s32.totalorder %s74, %s88
      %p90 = scmp.eq.s32.totalorder %s22, 0
      %p91 = por %p89, %p90
      %s93 = sadd.s32 %s92, 1
      %p96 = scmp.eq.s32.totalorder %s16, 1
      %p97 = scmp.ne.s32.totalorder %s92, %s94
      %p98 = scmp.eq.s32.totalorder %s16, 0
      %p99 = por %p97, %p98
      %p100 = scmp.ne.s32.totalorder %s92, %s94
      %p101 = scmp.eq.s32.totalorder %s21, 1
      %p102 = por %p100, %p101
      %p103 = scmp.ne.s32.totalorder %s94, %s95
      %p104 = scmp.eq.s32.totalorder %s21, 0
      %p105 = por %p103, %p104
      %p106 = scmp.ne.s32.totalorder %s94, %s95
      %p107 = scmp.eq.s32.totalorder %s22, 1
      %p108 = por %p106, %p107
      %p110 = scmp.ne.s32.totalorder %s95, %s109
      %p111 = scmp.eq.s32.totalorder %s22, 0
      %p112 = por %p110, %p111
      %s114 = sadd.s32 %s113, 1
      %p117 = scmp.eq.s32.totalorder %s16, 1
      %p118 = scmp.ne.s32.totalorder %s113, %s115
      %p119 = scmp.eq.s32.totalorder %s16, 0
      %p120 = por %p118, %p119
      %p121 = scmp.ne.s32.totalorder %s113, %s115
      %p122 = scmp.eq.s32.totalorder %s21, 1
      %p123 = por %p121, %p122
      %p124 = scmp.ne.s32.totalorder %s115, %s116
      %p125 = scmp.eq.s32.totalorder %s21, 0
      %p126 = por %p124, %p125
      %p127 = scmp.ne.s32.totalorder %s115, %s116
      %p128 = scmp.eq.s32.totalorder %s22, 1
      %p129 = por %p127, %p128
      %p131 = scmp.ne.s32.totalorder %s116, %s130
      %p132 = scmp.eq.s32.totalorder %s22, 0
      %p133 = por %p131, %p132
      %s135 = sadd.s32 %s134, 1
      %p138 = scmp.eq.s32.totalorder %s16, 1
      %p139 = scmp.ne.s32.totalorder %s134, %s136
      %p140 = scmp.eq.s32.totalorder %s16, 0
      %p141 = por %p139, %p140
      %p142 = scmp.ne.s32.totalorder %s134, %s136
      %p143 = scmp.eq.s32.totalorder %s21, 1
      %p144 = por %p142, %p143
      %p145 = scmp.ne.s32.totalorder %s136, %s137
      %p146 = scmp.eq.s32.totalorder %s21, 0
      %p147 = por %p145, %p146
      %p148 = scmp.ne.s32.totalorder %s136, %s137
      %p149 = scmp.eq.s32.totalorder %s22, 1
      %p150 = por %p148, %p149
      %p152 = scmp.ne.s32.totalorder %s137, %s151
      %p153 = scmp.eq.s32.totalorder %s22, 0
      %p154 = por %p152, %p153
      %s156 = sadd.s32 %s155, 1
      %p159 = scmp.eq.s32.totalorder %s16, 1
      %p160 = scmp.ne.s32.totalorder %s155, %s157
      %p161 = scmp.eq.s32.totalorder %s16, 0
      %p162 = por %p160, %p161
      %p163 = scmp.ne.s32.totalorder %s155, %s157
      %p164 = scmp.eq.s32.totalorder %s21, 1
      %p165 = por %p163, %p164
      %p166 = scmp.ne.s32.totalorder %s157, %s158
      %p167 = scmp.eq.s32.totalorder %s21, 0
      %p168 = por %p166, %p167
      %p169 = scmp.ne.s32.totalorder %s157, %s158
      %p170 = scmp.eq.s32.totalorder %s22, 1
      %p171 = por %p169, %p170
      %p173 = scmp.ne.s32.totalorder %s158, %s172
      %p174 = scmp.eq.s32.totalorder %s22, 0
      %p175 = por %p173, %p174
      %s176 = ssub.s32 %s16, %s23
      %p177 = scmp.eq.s32.totalorder %s176, 0
      %s179 = sadd.s32 %s178, 1
      %s180 = scalar_select %p177, %s178, %s179
      %p183 = pneg %p177
      %p184 = scmp.eq.s32.totalorder %s16, 1
      %p185 = por %p183, %p184
      %p186 = scmp.ne.s32.totalorder %s178, %s181
      %p187 = scmp.eq.s32.totalorder %s16, 0
      %p188 = por %p186, %p187
      %p189 = scmp.ne.s32.totalorder %s178, %s181
      %p190 = scmp.eq.s32.totalorder %s21, 1
      %p191 = por %p189, %p190
      %p192 = scmp.ne.s32.totalorder %s181, %s182
      %p193 = scmp.eq.s32.totalorder %s21, 0
      %p194 = por %p192, %p193
      %p195 = scmp.ne.s32.totalorder %s181, %s182
      %p196 = scmp.eq.s32.totalorder %s22, 1
      %p197 = por %p195, %p196
      %p199 = scmp.ne.s32.totalorder %s182, %s198
      %p200 = scmp.eq.s32.totalorder %s22, 0
      %p201 = por %p199, %p200
      %p202 = scmp.le.s32.totalorder 1, %s16
      %p203 = scmp.lt.s32.totalorder %s16, 3
      %p204 = pnand %p202, %p203
      %p205 = pneg %p204
      // Predicated region
      $region9: #{tpu_custom_call.1} parent=5 // pred_check
        _
      $region10: #{tpu_custom_call.1} parent=5 // pred_check_branch
        %207 = sbr.rel (%p204) target = $region12
      $region11: #{tpu_custom_call.1} parent=5 // pred_region
        %s208 = ssub.s32 %s16, 1
        // Predicated region
        $region13: #{tpu_custom_call.1} parent=11 // pred_check
          %p209 = pneg %p63
        $region14: #{tpu_custom_call.1} parent=11 // pred_check_branch
          %211 = sbr.rel (%p209) target = $region16
        $region15: #{tpu_custom_call.1} parent=11 // pred_region
          _
        $region16: #{tpu_custom_call.1} parent=11 // pred_fallthru
          _
        // Predicated region
        $region17: #{tpu_custom_call.1} parent=11 // pred_check
          %p212 = pneg %p84
        $region18: #{tpu_custom_call.1} parent=11 // pred_check_branch
          %214 = sbr.rel (%p212) target = $region20
        $region19: #{tpu_custom_call.1} parent=11 // pred_region
          _
        $region20: #{tpu_custom_call.1} parent=11 // pred_fallthru
          _
        // Predicated region
        $region21: #{tpu_custom_call.1} parent=11 // pred_check
          %p215 = pneg %p105
        $region22: #{tpu_custom_call.1} parent=11 // pred_check_branch
          %217 = sbr.rel (%p215) target = $region24
        $region23: #{tpu_custom_call.1} parent=11 // pred_region
          _
        $region24: #{tpu_custom_call.1} parent=11 // pred_fallthru
          _
        // Predicated region
        $region25: #{tpu_custom_call.1} parent=11 // pred_check
          %p218 = pneg %p126
        $region26: #{tpu_custom_call.1} parent=11 // pred_check_branch
          %220 = sbr.rel (%p218) target = $region28
        $region27: #{tpu_custom_call.1} parent=11 // pred_region
          _
        $region28: #{tpu_custom_call.1} parent=11 // pred_fallthru
          _
        // Predicated region
        $region29: #{tpu_custom_call.1} parent=11 // pred_check
          %p221 = pneg %p147
        $region30: #{tpu_custom_call.1} parent=11 // pred_check_branch
          %223 = sbr.rel (%p221) target = $region32
        $region31: #{tpu_custom_call.1} parent=11 // pred_region
          _
        $region32: #{tpu_custom_call.1} parent=11 // pred_fallthru
          _
        // Predicated region
        $region33: #{tpu_custom_call.1} parent=11 // pred_check
          %p224 = pneg %p168
        $region34: #{tpu_custom_call.1} parent=11 // pred_check_branch
          %226 = sbr.rel (%p224) target = $region36
        $region35: #{tpu_custom_call.1} parent=11 // pred_region
          _
        $region36: #{tpu_custom_call.1} parent=11 // pred_fallthru
          _
      $region12: #{tpu_custom_call.1} parent=5 // pred_fallthru
        _
      %p227 = scmp.lt.s32.totalorder %s16, 2
      // Predicated region
      $region37: #{tpu_custom_call.1} parent=5 // pred_check
        %p228 = pneg %p227
      $region38: #{tpu_custom_call.1} parent=5 // pred_check_branch
        %230 = sbr.rel (%p228) target = $region40
      $region39: #{tpu_custom_call.1} parent=5 // pred_region
        // Predicated region
        $region41: #{tpu_custom_call.1} parent=39 // pred_check
          %p231 = pneg %p36
        $region42: #{tpu_custom_call.1} parent=39 // pred_check_branch
          %233 = sbr.rel (%p231) target = $region44
        $region43: #{tpu_custom_call.1} parent=39 // pred_region
          %s234 = smul.u32 32, %s16
          %p235 = scmp.lt.s32.totalorder %s234, 63
          %s236 = scalar_select %p235, %s234, 63
          %s237 = smul.addr %s236, 8
          %s238 = scalar_lea.vmem %s0, %s237
          %s239 = smul.u32 32, %s16
        $region44: #{tpu_custom_call.1} parent=39 // pred_fallthru
          _
      $region40: #{tpu_custom_call.1} parent=5 // pred_fallthru
        _
      %p240 = scmp.le.s32.totalorder 1, %s16
      %p241 = scmp.lt.s32.totalorder %s16, 3
      %p242 = pnand %p240, %p241
      %p243 = pneg %p242
      // Predicated region
      $region45: #{tpu_custom_call.1} parent=5 // pred_check
        _
      $region46: #{tpu_custom_call.1} parent=5 // pred_check_branch
        %245 = sbr.rel (%p242) target = $region48
      $region47: #{tpu_custom_call.1} parent=5 // pred_region
        %s246 = ssub.s32 %s16, 1
        %s247 = smul.u32 32, %s21
        %p248 = scmp.lt.s32.totalorder %s247, 63
        %s249 = scalar_select %p248, %s247, 63
        %s250 = smul.addr %s249, 8
        %s251 = scalar_lea.vmem %s0, %s250
        %p252 = pneg %p42
        %p253 = pneg %p39
        %p254 = pneg %p63
        %p255 = pneg %p60
        %p256 = pneg %p84
        %p257 = pneg %p81
        %p258 = pneg %p105
        %p259 = pneg %p102
        %p260 = pneg %p126
        %p261 = pneg %p123
        %p262 = pneg %p147
        %p263 = pneg %p144
        %p264 = pneg %p168
        %p265 = pneg %p165
        %p266 = pneg %p194
        %p267 = pneg %p191
        %s268 = sand.u32 %s181, 1
        %s269 = scalar_lea.sflag [#allocation3], %s268
        %s270 = sand.u32 %s181, 1
        %s271 = smul.addr %s270, 256
        %s272 = scalar_lea.vmem [#allocation2], %s271
        %s273 = smul.u32 32, %s21
        %p274 = scmp.lt.s32.totalorder %s273, 63
        %s275 = scalar_select %p274, %s273, 63
        %s276 = smul.addr %s275, 8
        %s277 = scalar_lea.vmem %s0, %s276
        %s278 = smul.u32 32, %s21
        %s279 = smul.u32 32, %s21
        %v281 = vld [vmem:[%s277] sm:$0xff]
        %v282 = vld [vmem:[%s277 + $0x8] sm:$0xff]
        %v283 = vld [vmem:[%s277 + $0x10] sm:$0xff]
        %v284 = vld [vmem:[%s277 + $0x18] sm:$0xff]
        %v285 = vld [vmem:[%s277 + $0x20] sm:$0xff]
        %v286 = vld [vmem:[%s277 + $0x28] sm:$0xff]
        %v287 = vld [vmem:[%s277 + $0x30] sm:$0xff]
        %v288 = vld [vmem:[%s277 + $0x38] sm:$0xff]
        %v289 = vld [vmem:[%s277 + $0x40] sm:$0xff]
        %v290 = vld [vmem:[%s277 + $0x48] sm:$0xff]
        %v291 = vld [vmem:[%s277 + $0x50] sm:$0xff]
        %v292 = vld [vmem:[%s277 + $0x58] sm:$0xff]
        %v293 = vld [vmem:[%s277 + $0x60] sm:$0xff]
        %v294 = vld [vmem:[%s277 + $0x68] sm:$0xff]
        %v295 = vld [vmem:[%s277 + $0x70] sm:$0xff]
        %v296 = vld [vmem:[%s277 + $0x78] sm:$0xff]
        %v297 = vld [vmem:[%s277 + $0x80] sm:$0xff]
        %v298 = vld [vmem:[%s277 + $0x88] sm:$0xff]
        %v299 = vld [vmem:[%s277 + $0x90] sm:$0xff]
        %v300 = vld [vmem:[%s277 + $0x98] sm:$0xff]
        %v301 = vld [vmem:[%s277 + $0xa0] sm:$0xff]
        %v302 = vld [vmem:[%s277 + $0xa8] sm:$0xff]
        %v303 = vld [vmem:[%s277 + $0xb0] sm:$0xff]
        %v304 = vld [vmem:[%s277 + $0xb8] sm:$0xff]
        %v305 = vld [vmem:[%s277 + $0xc0] sm:$0xff]
        %v306 = vld [vmem:[%s277 + $0xc8] sm:$0xff]
        %v307 = vld [vmem:[%s277 + $0xd0] sm:$0xff]
        %v308 = vld [vmem:[%s277 + $0xd8] sm:$0xff]
        %v309 = vld [vmem:[%s277 + $0xe0] sm:$0xff]
        %v310 = vld [vmem:[%s277 + $0xe8] sm:$0xff]
        %v311 = vld [vmem:[%s277 + $0xf0] sm:$0xff]
        %v312 = vld [vmem:[%s277 + $0xf8] sm:$0xff]
        %v313 = vpack.c.bf16 %v282, %v281
        %v314 = vpack.c.bf16 %v284, %v283
        %v315 = vpack.c.bf16 %v286, %v285
        %v316 = vpack.c.bf16 %v288, %v287
        %v317 = vpack.c.bf16 %v290, %v289
        %v318 = vpack.c.bf16 %v292, %v291
        %v319 = vpack.c.bf16 %v294, %v293
        %v320 = vpack.c.bf16 %v296, %v295
        %v321 = vpack.c.bf16 %v298, %v297
        %v322 = vpack.c.bf16 %v300, %v299
        %v323 = vpack.c.bf16 %v302, %v301
        %v324 = vpack.c.bf16 %v304, %v303
        %v325 = vpack.c.bf16 %v306, %v305
        %v326 = vpack.c.bf16 %v308, %v307
        %v327 = vpack.c.bf16 %v310, %v309
        %v328 = vpack.c.bf16 %v312, %v311
        %v329 = vld [vmem:[%s1] sm:$0xf]
        %v330 = vld [vmem:[%s1 + $0x4] sm:$0x3]
        %v331 = vld [vmem:[%s2] sm:$0x1]
        %v333 = vperm.slane %v331, 0
        %v337 = vunpack.c.l.b16 %v329
        %v338 = vunpack.c.l.b16 %v330
        %v339 = vpack.c.b16 %v338, %v337
        %vm340 = vcmask 97280
        %v342 = vsel %vm340, %v313, 0
        %v345 = vsel %vm340, %v314, 0
        %v348 = vsel %vm340, %v315, 0
        %v351 = vsel %vm340, %v316, 0
        %v354 = vsel %vm340, %v317, 0
        %v357 = vsel %vm340, %v318, 0
        %v360 = vsel %vm340, %v319, 0
        %v363 = vsel %vm340, %v320, 0
        %v366 = vsel %vm340, %v321, 0
        %v369 = vsel %vm340, %v322, 0
        %v372 = vsel %vm340, %v323, 0
        %v375 = vsel %vm340, %v324, 0
        %v378 = vsel %vm340, %v325, 0
        %v381 = vsel %vm340, %v326, 0
        %v384 = vsel %vm340, %v327, 0
        %v387 = vsel %vm340, %v328, 0
        %vm389 = vcmask 1045504
        %v391 = vsel %vm389, %v339, 0
        %393 = vmatpush.bf16.msra.mxu0 0
        %394 = vmatpush.bf16.msra.mxu0 0
        %395 = vmatpush.bf16.msra.mxu0 0
        %396 = vmatpush.bf16.msra.mxu0 0
        %397 = vmatpush.bf16.msra.mxu0 0
        %398 = vmatpush.bf16.msra.mxu0 0
        %399 = vmatpush.bf16.msra.mxu0 0
        %400 = vmatpush.bf16.msra.mxu0 %v391
        %401 = vmatmul.bf16.gmra.mxu0 %v342
        %v402 = vpop.f32.mrf.mxu0
        %v403 = vadd.f32 %v333, %v402
        %v404 = vpop.f32.mrf.mxu0
        %v405 = vadd.f32 %v333, %v404
        %406 = vmatmul.bf16.gmra.mxu0 %v345
        %v407 = vpop.f32.mrf.mxu0
        %v408 = vadd.f32 %v333, %v407
        %v409 = vpop.f32.mrf.mxu0
        %v410 = vadd.f32 %v333, %v409
        %411 = vmatmul.bf16.gmra.mxu0 %v348
        %v412 = vpop.f32.mrf.mxu0
        %v413 = vadd.f32 %v333, %v412
        %v414 = vpop.f32.mrf.mxu0
        %v415 = vadd.f32 %v333, %v414
        %416 = vmatmul.bf16.gmra.mxu0 %v351
        %v417 = vpop.f32.mrf.mxu0
        %v418 = vadd.f32 %v333, %v417
        %v419 = vpop.f32.mrf.mxu0
        %v420 = vadd.f32 %v333, %v419
        %421 = vmatmul.bf16.gmra.mxu0 %v354
        %v422 = vpop.f32.mrf.mxu0
        %v423 = vadd.f32 %v333, %v422
        %v424 = vpop.f32.mrf.mxu0
        %v425 = vadd.f32 %v333, %v424
        %426 = vmatmul.bf16.gmra.mxu0 %v357
        %v427 = vpop.f32.mrf.mxu0
        %v428 = vadd.f32 %v333, %v427
        %v429 = vpop.f32.mrf.mxu0
        %v430 = vadd.f32 %v333, %v429
        %431 = vmatmul.bf16.gmra.mxu0 %v360
        %v432 = vpop.f32.mrf.mxu0
        %v433 = vadd.f32 %v333, %v432
        %v434 = vpop.f32.mrf.mxu0
        %v435 = vadd.f32 %v333, %v434
        %436 = vmatmul.bf16.gmra.mxu0 %v363
        %v437 = vpop.f32.mrf.mxu0
        %v438 = vadd.f32 %v333, %v437
        %v439 = vpop.f32.mrf.mxu0
        %v440 = vadd.f32 %v333, %v439
        %441 = vmatmul.bf16.gmra.mxu0 %v366
        %v442 = vpop.f32.mrf.mxu0
        %v443 = vadd.f32 %v333, %v442
        %v444 = vpop.f32.mrf.mxu0
        %v445 = vadd.f32 %v333, %v444
        %446 = vmatmul.bf16.gmra.mxu0 %v369
        %v447 = vpop.f32.mrf.mxu0
        %v448 = vadd.f32 %v333, %v447
        %v449 = vpop.f32.mrf.mxu0
        %v450 = vadd.f32 %v333, %v449
        %451 = vmatmul.bf16.gmra.mxu0 %v372
        %v452 = vpop.f32.mrf.mxu0
        %v453 = vadd.f32 %v333, %v452
        %v454 = vpop.f32.mrf.mxu0
        %v455 = vadd.f32 %v333, %v454
        %456 = vmatmul.bf16.gmra.mxu0 %v375
        %v457 = vpop.f32.mrf.mxu0
        %v458 = vadd.f32 %v333, %v457
        %v459 = vpop.f32.mrf.mxu0
        %v460 = vadd.f32 %v333, %v459
        %461 = vmatmul.bf16.gmra.mxu0 %v378
        %v462 = vpop.f32.mrf.mxu0
        %v463 = vadd.f32 %v333, %v462
        %v464 = vpop.f32.mrf.mxu0
        %v465 = vadd.f32 %v333, %v464
        %466 = vmatmul.bf16.gmra.mxu0 %v381
        %v467 = vpop.f32.mrf.mxu0
        %v468 = vadd.f32 %v333, %v467
        %v469 = vpop.f32.mrf.mxu0
        %v470 = vadd.f32 %v333, %v469
        %471 = vmatmul.bf16.gmra.mxu0 %v384
        %v472 = vpop.f32.mrf.mxu0
        %v473 = vadd.f32 %v333, %v472
        %v474 = vpop.f32.mrf.mxu0
        %v475 = vadd.f32 %v333, %v474
        %476 = vmatmul.bf16.gmra.mxu0 %v387
        %v477 = vpop.f32.mrf.mxu0
        %v478 = vadd.f32 %v333, %v477
        %v479 = vpop.f32.mrf.mxu0
        %v480 = vadd.f32 %v333, %v479
        %481 = vdwg.mxu0
        %v482 = vmax.f32 %v403, 0.0
        %v483 = vmax.f32 %v405, 0.0
        %v484 = vmax.f32 %v408, 0.0
        %v485 = vmax.f32 %v410, 0.0
        %v486 = vmax.f32 %v413, 0.0
        %v487 = vmax.f32 %v415, 0.0
        %v488 = vmax.f32 %v418, 0.0
        %v489 = vmax.f32 %v420, 0.0
        %v490 = vmax.f32 %v423, 0.0
        %v491 = vmax.f32 %v425, 0.0
        %v492 = vmax.f32 %v428, 0.0
        %v493 = vmax.f32 %v430, 0.0
        %v494 = vmax.f32 %v433, 0.0
        %v495 = vmax.f32 %v435, 0.0
        %v496 = vmax.f32 %v438, 0.0
        %v497 = vmax.f32 %v440, 0.0
        %v498 = vmax.f32 %v443, 0.0
        %v499 = vmax.f32 %v445, 0.0
        %v500 = vmax.f32 %v448, 0.0
        %v501 = vmax.f32 %v450, 0.0
        %v502 = vmax.f32 %v453, 0.0
        %v503 = vmax.f32 %v455, 0.0
        %v504 = vmax.f32 %v458, 0.0
        %v505 = vmax.f32 %v460, 0.0
        %v506 = vmax.f32 %v463, 0.0
        %v507 = vmax.f32 %v465, 0.0
        %v508 = vmax.f32 %v468, 0.0
        %v509 = vmax.f32 %v470, 0.0
        %v510 = vmax.f32 %v473, 0.0
        %v511 = vmax.f32 %v475, 0.0
        %v512 = vmax.f32 %v478, 0.0
        %v513 = vmax.f32 %v480, 0.0
        %v514 = vpack.c.bf16 %v483, %v482
        %v515 = vpack.c.bf16 %v485, %v484
        %v516 = vpack.c.bf16 %v487, %v486
        %v517 = vpack.c.bf16 %v489, %v488
        %v518 = vpack.c.bf16 %v491, %v490
        %v519 = vpack.c.bf16 %v493, %v492
        %v520 = vpack.c.bf16 %v495, %v494
        %v521 = vpack.c.bf16 %v497, %v496
        %v522 = vpack.c.bf16 %v499, %v498
        %v523 = vpack.c.bf16 %v501, %v500
        %v524 = vpack.c.bf16 %v503, %v502
        %v525 = vpack.c.bf16 %v505, %v504
        %v526 = vpack.c.bf16 %v507, %v506
        %v527 = vpack.c.bf16 %v509, %v508
        %v528 = vpack.c.bf16 %v511, %v510
        %v529 = vpack.c.bf16 %v513, %v512
        %v530 = vld [vmem:[%s3] sm:$0xf]
        %v531 = vld [vmem:[%s3 + $0x4] sm:$0xf]
        %v532 = vld [vmem:[%s3 + $0x8] sm:$0xf]
        %v533 = vld [vmem:[%s3 + $0xc] sm:$0xf]
        %v534 = vld [vmem:[%s3 + $0x10] sm:$0xf]
        %v535 = vld [vmem:[%s3 + $0x14] sm:$0xf]
        %v536 = vld [vmem:[%s3 + $0x18] sm:$0xf]
        %v537 = vld [vmem:[%s3 + $0x1c] sm:$0xf]
        %v538 = vld [vmem:[%s3 + $0x20] sm:$0xf]
        %v539 = vld [vmem:[%s3 + $0x24] sm:$0xf]
        %v540 = vld [vmem:[%s3 + $0x28] sm:$0xf]
        %v541 = vld [vmem:[%s3 + $0x2c] sm:$0xf]
        %v542 = vld [vmem:[%s3 + $0x30] sm:$0xf]
        %v543 = vld [vmem:[%s3 + $0x34] sm:$0xf]
        %v544 = vld [vmem:[%s3 + $0x38] sm:$0xf]
        %v545 = vld [vmem:[%s3 + $0x3c] sm:$0xf]
        %v546 = vld [vmem:[%s4] sm:$0x1]
        %v548 = vperm.slane %v546, 0
        %v566 = vunpack.c.l.b16 %v530
        %v567 = vunpack.c.l.b16 %v531
        %v568 = vunpack.c.l.b16 %v532
        %v569 = vunpack.c.l.b16 %v533
        %v570 = vunpack.c.l.b16 %v534
        %v571 = vunpack.c.l.b16 %v535
        %v572 = vunpack.c.l.b16 %v536
        %v573 = vunpack.c.l.b16 %v537
        %v574 = vunpack.c.l.b16 %v538
        %v575 = vunpack.c.l.b16 %v539
        %v576 = vunpack.c.l.b16 %v540
        %v577 = vunpack.c.l.b16 %v541
        %v578 = vunpack.c.l.b16 %v542
        %v579 = vunpack.c.l.b16 %v543
        %v580 = vunpack.c.l.b16 %v544
        %v581 = vunpack.c.l.b16 %v545
        %v582 = vpack.c.b16 %v567, %v566
        %v583 = vpack.c.b16 %v569, %v568
        %v584 = vpack.c.b16 %v571, %v570
        %v585 = vpack.c.b16 %v573, %v572
        %v586 = vpack.c.b16 %v575, %v574
        %v587 = vpack.c.b16 %v577, %v576
        %v588 = vpack.c.b16 %v579, %v578
        %v589 = vpack.c.b16 %v581, %v580
        %598 = vmatpush.bf16.msra.mxu0 %v589
        %599 = vmatpush.bf16.msra.mxu0 %v588
        %600 = vmatpush.bf16.msra.mxu0 %v587
        %601 = vmatpush.bf16.msra.mxu0 %v586
        %602 = vmatpush.bf16.msra.mxu0 %v585
        %603 = vmatpush.bf16.msra.mxu0 %v584
        %604 = vmatpush.bf16.msra.mxu0 %v583
        %605 = vmatpush.bf16.msra.mxu0 %v582
        %606 = vmatmul.bf16.gmra.mxu0 %v514
        %v607 = vpop.f32.mrf.mxu0
        %v608 = vadd.f32 %v548, %v607
        %v609 = vpop.f32.mrf.mxu0
        %v610 = vadd.f32 %v548, %v609
        %611 = vmatmul.bf16.gmra.mxu0 %v515
        %v612 = vpop.f32.mrf.mxu0
        %v613 = vadd.f32 %v548, %v612
        %v614 = vpop.f32.mrf.mxu0
        %v615 = vadd.f32 %v548, %v614
        %616 = vmatmul.bf16.gmra.mxu0 %v516
        %v617 = vpop.f32.mrf.mxu0
        %v618 = vadd.f32 %v548, %v617
        %v619 = vpop.f32.mrf.mxu0
        %v620 = vadd.f32 %v548, %v619
        %621 = vmatmul.bf16.gmra.mxu0 %v517
        %v622 = vpop.f32.mrf.mxu0
        %v623 = vadd.f32 %v548, %v622
        %v624 = vpop.f32.mrf.mxu0
        %v625 = vadd.f32 %v548, %v624
        %626 = vmatmul.bf16.gmra.mxu0 %v518
        %v627 = vpop.f32.mrf.mxu0
        %v628 = vadd.f32 %v548, %v627
        %v629 = vpop.f32.mrf.mxu0
        %v630 = vadd.f32 %v548, %v629
        %631 = vmatmul.bf16.gmra.mxu0 %v519
        %v632 = vpop.f32.mrf.mxu0
        %v633 = vadd.f32 %v548, %v632
        %v634 = vpop.f32.mrf.mxu0
        %v635 = vadd.f32 %v548, %v634
        %636 = vmatmul.bf16.gmra.mxu0 %v520
        %v637 = vpop.f32.mrf.mxu0
        %v638 = vadd.f32 %v548, %v637
        %v639 = vpop.f32.mrf.mxu0
        %v640 = vadd.f32 %v548, %v639
        %641 = vmatmul.bf16.gmra.mxu0 %v521
        %v642 = vpop.f32.mrf.mxu0
        %v643 = vadd.f32 %v548, %v642
        %v644 = vpop.f32.mrf.mxu0
        %v645 = vadd.f32 %v548, %v644
        %646 = vmatmul.bf16.gmra.mxu0 %v522
        %v647 = vpop.f32.mrf.mxu0
        %v648 = vadd.f32 %v548, %v647
        %v649 = vpop.f32.mrf.mxu0
        %v650 = vadd.f32 %v548, %v649
        %651 = vmatmul.bf16.gmra.mxu0 %v523
        %v652 = vpop.f32.mrf.mxu0
        %v653 = vadd.f32 %v548, %v652
        %v654 = vpop.f32.mrf.mxu0
        %v655 = vadd.f32 %v548, %v654
        %656 = vmatmul.bf16.gmra.mxu0 %v524
        %v657 = vpop.f32.mrf.mxu0
        %v658 = vadd.f32 %v548, %v657
        %v659 = vpop.f32.mrf.mxu0
        %v660 = vadd.f32 %v548, %v659
        %661 = vmatmul.bf16.gmra.mxu0 %v525
        %v662 = vpop.f32.mrf.mxu0
        %v663 = vadd.f32 %v548, %v662
        %v664 = vpop.f32.mrf.mxu0
        %v665 = vadd.f32 %v548, %v664
        %666 = vmatmul.bf16.gmra.mxu0 %v526
        %v667 = vpop.f32.mrf.mxu0
        %v668 = vadd.f32 %v548, %v667
        %v669 = vpop.f32.mrf.mxu0
        %v670 = vadd.f32 %v548, %v669
        %671 = vmatmul.bf16.gmra.mxu0 %v527
        %v672 = vpop.f32.mrf.mxu0
        %v673 = vadd.f32 %v548, %v672
        %v674 = vpop.f32.mrf.mxu0
        %v675 = vadd.f32 %v548, %v674
        %676 = vmatmul.bf16.gmra.mxu0 %v528
        %v677 = vpop.f32.mrf.mxu0
        %v678 = vadd.f32 %v548, %v677
        %v679 = vpop.f32.mrf.mxu0
        %v680 = vadd.f32 %v548, %v679
        %681 = vmatmul.bf16.gmra.mxu0 %v529
        %v682 = vpop.f32.mrf.mxu0
        %v683 = vadd.f32 %v548, %v682
        %v684 = vpop.f32.mrf.mxu0
        %v685 = vadd.f32 %v548, %v684
        %686 = vdwg.mxu0
        %v687 = vmax.f32 %v608, 0.0
        %v688 = vmax.f32 %v610, 0.0
        %v689 = vmax.f32 %v613, 0.0
        %v690 = vmax.f32 %v615, 0.0
        %v691 = vmax.f32 %v618, 0.0
        %v692 = vmax.f32 %v620, 0.0
        %v693 = vmax.f32 %v623, 0.0
        %v694 = vmax.f32 %v625, 0.0
        %v695 = vmax.f32 %v628, 0.0
        %v696 = vmax.f32 %v630, 0.0
        %v697 = vmax.f32 %v633, 0.0
        %v698 = vmax.f32 %v635, 0.0
        %v699 = vmax.f32 %v638, 0.0
        %v700 = vmax.f32 %v640, 0.0
        %v701 = vmax.f32 %v643, 0.0
        %v702 = vmax.f32 %v645, 0.0
        %v703 = vmax.f32 %v648, 0.0
        %v704 = vmax.f32 %v650, 0.0
        %v705 = vmax.f32 %v653, 0.0
        %v706 = vmax.f32 %v655, 0.0
        %v707 = vmax.f32 %v658, 0.0
        %v708 = vmax.f32 %v660, 0.0
        %v709 = vmax.f32 %v663, 0.0
        %v710 = vmax.f32 %v665, 0.0
        %v711 = vmax.f32 %v668, 0.0
        %v712 = vmax.f32 %v670, 0.0
        %v713 = vmax.f32 %v673, 0.0
        %v714 = vmax.f32 %v675, 0.0
        %v715 = vmax.f32 %v678, 0.0
        %v716 = vmax.f32 %v680, 0.0
        %v717 = vmax.f32 %v683, 0.0
        %v718 = vmax.f32 %v685, 0.0
        %v719 = vpack.c.bf16 %v688, %v687
        %v720 = vpack.c.bf16 %v690, %v689
        %v721 = vpack.c.bf16 %v692, %v691
        %v722 = vpack.c.bf16 %v694, %v693
        %v723 = vpack.c.bf16 %v696, %v695
        %v724 = vpack.c.bf16 %v698, %v697
        %v725 = vpack.c.bf16 %v700, %v699
        %v726 = vpack.c.bf16 %v702, %v701
        %v727 = vpack.c.bf16 %v704, %v703
        %v728 = vpack.c.bf16 %v706, %v705
        %v729 = vpack.c.bf16 %v708, %v707
        %v730 = vpack.c.bf16 %v710, %v709
        %v731 = vpack.c.bf16 %v712, %v711
        %v732 = vpack.c.bf16 %v714, %v713
        %v733 = vpack.c.bf16 %v716, %v715
        %v734 = vpack.c.bf16 %v718, %v717
        %v735 = vld [vmem:[%s5] sm:$0xf]
        %v736 = vld [vmem:[%s5 + $0x4] sm:$0xf]
        %v737 = vld [vmem:[%s5 + $0x8] sm:$0xf]
        %v738 = vld [vmem:[%s5 + $0xc] sm:$0xf]
        %v739 = vld [vmem:[%s5 + $0x10] sm:$0xf]
        %v740 = vld [vmem:[%s5 + $0x14] sm:$0xf]
        %v741 = vld [vmem:[%s5 + $0x18] sm:$0xf]
        %v742 = vld [vmem:[%s5 + $0x1c] sm:$0xf]
        %v743 = vld [vmem:[%s5 + $0x20] sm:$0xf]
        %v744 = vld [vmem:[%s5 + $0x24] sm:$0xf]
        %v745 = vld [vmem:[%s5 + $0x28] sm:$0xf]
        %v746 = vld [vmem:[%s5 + $0x2c] sm:$0xf]
        %v747 = vld [vmem:[%s5 + $0x30] sm:$0xf]
        %v748 = vld [vmem:[%s5 + $0x34] sm:$0xf]
        %v749 = vld [vmem:[%s5 + $0x38] sm:$0xf]
        %v750 = vld [vmem:[%s5 + $0x3c] sm:$0xf]
        %v751 = vld [vmem:[%s6] sm:$0x1]
        %v753 = vperm.slane %v751, 0
        %v771 = vunpack.c.l.b16 %v735
        %v772 = vunpack.c.l.b16 %v736
        %v773 = vunpack.c.l.b16 %v737
        %v774 = vunpack.c.l.b16 %v738
        %v775 = vunpack.c.l.b16 %v739
        %v776 = vunpack.c.l.b16 %v740
        %v777 = vunpack.c.l.b16 %v741
        %v778 = vunpack.c.l.b16 %v742
        %v779 = vunpack.c.l.b16 %v743
        %v780 = vunpack.c.l.b16 %v744
        %v781 = vunpack.c.l.b16 %v745
        %v782 = vunpack.c.l.b16 %v746
        %v783 = vunpack.c.l.b16 %v747
        %v784 = vunpack.c.l.b16 %v748
        %v785 = vunpack.c.l.b16 %v749
        %v786 = vunpack.c.l.b16 %v750
        %v787 = vpack.c.b16 %v772, %v771
        %v788 = vpack.c.b16 %v774, %v773
        %v789 = vpack.c.b16 %v776, %v775
        %v790 = vpack.c.b16 %v778, %v777
        %v791 = vpack.c.b16 %v780, %v779
        %v792 = vpack.c.b16 %v782, %v781
        %v793 = vpack.c.b16 %v784, %v783
        %v794 = vpack.c.b16 %v786, %v785
        %803 = vmatpush.bf16.msra.mxu0 %v794
        %804 = vmatpush.bf16.msra.mxu0 %v793
        %805 = vmatpush.bf16.msra.mxu0 %v792
        %806 = vmatpush.bf16.msra.mxu0 %v791
        %807 = vmatpush.bf16.msra.mxu0 %v790
        %808 = vmatpush.bf16.msra.mxu0 %v789
        %809 = vmatpush.bf16.msra.mxu0 %v788
        %810 = vmatpush.bf16.msra.mxu0 %v787
        %811 = vmatmul.bf16.gmra.mxu0 %v719
        %v812 = vpop.f32.mrf.mxu0
        %v813 = vadd.f32 %v753, %v812
        %v814 = vpop.f32.mrf.mxu0
        %v815 = vadd.f32 %v753, %v814
        %816 = vmatmul.bf16.gmra.mxu0 %v720
        %v817 = vpop.f32.mrf.mxu0
        %v818 = vadd.f32 %v753, %v817
        %v819 = vpop.f32.mrf.mxu0
        %v820 = vadd.f32 %v753, %v819
        %821 = vmatmul.bf16.gmra.mxu0 %v721
        %v822 = vpop.f32.mrf.mxu0
        %v823 = vadd.f32 %v753, %v822
        %v824 = vpop.f32.mrf.mxu0
        %v825 = vadd.f32 %v753, %v824
        %826 = vmatmul.bf16.gmra.mxu0 %v722
        %v827 = vpop.f32.mrf.mxu0
        %v828 = vadd.f32 %v753, %v827
        %v829 = vpop.f32.mrf.mxu0
        %v830 = vadd.f32 %v753, %v829
        %831 = vmatmul.bf16.gmra.mxu0 %v723
        %v832 = vpop.f32.mrf.mxu0
        %v833 = vadd.f32 %v753, %v832
        %v834 = vpop.f32.mrf.mxu0
        %v835 = vadd.f32 %v753, %v834
        %836 = vmatmul.bf16.gmra.mxu0 %v724
        %v837 = vpop.f32.mrf.mxu0
        %v838 = vadd.f32 %v753, %v837
        %v839 = vpop.f32.mrf.mxu0
        %v840 = vadd.f32 %v753, %v839
        %841 = vmatmul.bf16.gmra.mxu0 %v725
        %v842 = vpop.f32.mrf.mxu0
        %v843 = vadd.f32 %v753, %v842
        %v844 = vpop.f32.mrf.mxu0
        %v845 = vadd.f32 %v753, %v844
        %846 = vmatmul.bf16.gmra.mxu0 %v726
        %v847 = vpop.f32.mrf.mxu0
        %v848 = vadd.f32 %v753, %v847
        %v849 = vpop.f32.mrf.mxu0
        %v850 = vadd.f32 %v753, %v849
        %851 = vmatmul.bf16.gmra.mxu0 %v727
        %v852 = vpop.f32.mrf.mxu0
        %v853 = vadd.f32 %v753, %v852
        %v854 = vpop.f32.mrf.mxu0
        %v855 = vadd.f32 %v753, %v854
        %856 = vmatmul.bf16.gmra.mxu0 %v728
        %v857 = vpop.f32.mrf.mxu0
        %v858 = vadd.f32 %v753, %v857
        %v859 = vpop.f32.mrf.mxu0
        %v860 = vadd.f32 %v753, %v859
        %861 = vmatmul.bf16.gmra.mxu0 %v729
        %v862 = vpop.f32.mrf.mxu0
        %v863 = vadd.f32 %v753, %v862
        %v864 = vpop.f32.mrf.mxu0
        %v865 = vadd.f32 %v753, %v864
        %866 = vmatmul.bf16.gmra.mxu0 %v730
        %v867 = vpop.f32.mrf.mxu0
        %v868 = vadd.f32 %v753, %v867
        %v869 = vpop.f32.mrf.mxu0
        %v870 = vadd.f32 %v753, %v869
        %871 = vmatmul.bf16.gmra.mxu0 %v731
        %v872 = vpop.f32.mrf.mxu0
        %v873 = vadd.f32 %v753, %v872
        %v874 = vpop.f32.mrf.mxu0
        %v875 = vadd.f32 %v753, %v874
        %876 = vmatmul.bf16.gmra.mxu0 %v732
        %v877 = vpop.f32.mrf.mxu0
        %v878 = vadd.f32 %v753, %v877
        %v879 = vpop.f32.mrf.mxu0
        %v880 = vadd.f32 %v753, %v879
        %881 = vmatmul.bf16.gmra.mxu0 %v733
        %v882 = vpop.f32.mrf.mxu0
        %v883 = vadd.f32 %v753, %v882
        %v884 = vpop.f32.mrf.mxu0
        %v885 = vadd.f32 %v753, %v884
        %886 = vmatmul.bf16.gmra.mxu0 %v734
        %v887 = vpop.f32.mrf.mxu0
        %v888 = vadd.f32 %v753, %v887
        %v889 = vpop.f32.mrf.mxu0
        %v890 = vadd.f32 %v753, %v889
        %891 = vdwg.mxu0
        %v892 = vtanh.pop %v813
        %v893 = vtanh.pop %v815
        %v894 = vtanh.pop %v818
        %v895 = vtanh.pop %v820
        %v896 = vtanh.pop %v823
        %v897 = vtanh.pop %v825
        %v898 = vtanh.pop %v828
        %v899 = vtanh.pop %v830
        %v900 = vtanh.pop %v833
        %v901 = vtanh.pop %v835
        %v902 = vtanh.pop %v838
        %v903 = vtanh.pop %v840
        %v904 = vtanh.pop %v843
        %v905 = vtanh.pop %v845
        %v906 = vtanh.pop %v848
        %v907 = vtanh.pop %v850
        %v908 = vtanh.pop %v853
        %v909 = vtanh.pop %v855
        %v910 = vtanh.pop %v858
        %v911 = vtanh.pop %v860
        %v912 = vtanh.pop %v863
        %v913 = vtanh.pop %v865
        %v914 = vtanh.pop %v868
        %v915 = vtanh.pop %v870
        %v916 = vtanh.pop %v873
        %v917 = vtanh.pop %v875
        %v918 = vtanh.pop %v878
        %v919 = vtanh.pop %v880
        %v920 = vtanh.pop %v883
        %v921 = vtanh.pop %v885
        %v922 = vtanh.pop %v888
        %v923 = vtanh.pop %v890
        %v924 = vmul.f32 %v892, 2.0
        %v925 = vmul.f32 %v893, 2.0
        %v926 = vmul.f32 %v894, 2.0
        %v927 = vmul.f32 %v895, 2.0
        %v928 = vmul.f32 %v896, 2.0
        %v929 = vmul.f32 %v897, 2.0
        %v930 = vmul.f32 %v898, 2.0
        %v931 = vmul.f32 %v899, 2.0
        %v932 = vmul.f32 %v900, 2.0
        %v933 = vmul.f32 %v901, 2.0
        %v934 = vmul.f32 %v902, 2.0
        %v935 = vmul.f32 %v903, 2.0
        %v936 = vmul.f32 %v904, 2.0
        %v937 = vmul.f32 %v905, 2.0
        %v938 = vmul.f32 %v906, 2.0
        %v939 = vmul.f32 %v907, 2.0
        %v940 = vmul.f32 %v908, 2.0
        %v941 = vmul.f32 %v909, 2.0
        %v942 = vmul.f32 %v910, 2.0
        %v943 = vmul.f32 %v911, 2.0
        %v944 = vmul.f32 %v912, 2.0
        %v945 = vmul.f32 %v913, 2.0
        %v946 = vmul.f32 %v914, 2.0
        %v947 = vmul.f32 %v915, 2.0
        %v948 = vmul.f32 %v916, 2.0
        %v949 = vmul.f32 %v917, 2.0
        %v950 = vmul.f32 %v918, 2.0
        %v951 = vmul.f32 %v919, 2.0
        %v952 = vmul.f32 %v920, 2.0
        %v953 = vmul.f32 %v921, 2.0
        %v954 = vmul.f32 %v922, 2.0
        %v955 = vmul.f32 %v923, 2.0
        %956 = vst [vmem:[%s272] sm:$0xff] %v924
        %957 = vst [vmem:[%s272 + $0x8] sm:$0xff] %v925
        %958 = vst [vmem:[%s272 + $0x10] sm:$0xff] %v926
        %959 = vst [vmem:[%s272 + $0x18] sm:$0xff] %v927
        %960 = vst [vmem:[%s272 + $0x20] sm:$0xff] %v928
        %961 = vst [vmem:[%s272 + $0x28] sm:$0xff] %v929
        %962 = vst [vmem:[%s272 + $0x30] sm:$0xff] %v930
        %963 = vst [vmem:[%s272 + $0x38] sm:$0xff] %v931
        %964 = vst [vmem:[%s272 + $0x40] sm:$0xff] %v932
        %965 = vst [vmem:[%s272 + $0x48] sm:$0xff] %v933
        %966 = vst [vmem:[%s272 + $0x50] sm:$0xff] %v934
        %967 = vst [vmem:[%s272 + $0x58] sm:$0xff] %v935
        %968 = vst [vmem:[%s272 + $0x60] sm:$0xff] %v936
        %969 = vst [vmem:[%s272 + $0x68] sm:$0xff] %v937
        %970 = vst [vmem:[%s272 + $0x70] sm:$0xff] %v938
        %971 = vst [vmem:[%s272 + $0x78] sm:$0xff] %v939
        %972 = vst [vmem:[%s272 + $0x80] sm:$0xff] %v940
        %973 = vst [vmem:[%s272 + $0x88] sm:$0xff] %v941
        %974 = vst [vmem:[%s272 + $0x90] sm:$0xff] %v942
        %975 = vst [vmem:[%s272 + $0x98] sm:$0xff] %v943
        %976 = vst [vmem:[%s272 + $0xa0] sm:$0xff] %v944
        %977 = vst [vmem:[%s272 + $0xa8] sm:$0xff] %v945
        %978 = vst [vmem:[%s272 + $0xb0] sm:$0xff] %v946
        %979 = vst [vmem:[%s272 + $0xb8] sm:$0xff] %v947
        %980 = vst [vmem:[%s272 + $0xc0] sm:$0xff] %v948
        %981 = vst [vmem:[%s272 + $0xc8] sm:$0xff] %v949
        %982 = vst [vmem:[%s272 + $0xd0] sm:$0xff] %v950
        %983 = vst [vmem:[%s272 + $0xd8] sm:$0xff] %v951
        %984 = vst [vmem:[%s272 + $0xe0] sm:$0xff] %v952
        %985 = vst [vmem:[%s272 + $0xe8] sm:$0xff] %v953
        %986 = vst [vmem:[%s272 + $0xf0] sm:$0xff] %v954
        %987 = vst [vmem:[%s272 + $0xf8] sm:$0xff] %v955
        %s988 = sand.u32 %s181, 1
        %s989 = scalar_lea.sflag [#allocation3], %s988
        %s990 = sand.u32 %s181, 1
        %s991 = smul.addr %s990, 256
        %s992 = scalar_lea.vmem [#allocation2], %s991
        // Predicated region
        $region49: #{tpu_custom_call.1} parent=47 // pred_check
          %p993 = pneg %p191
        $region50: #{tpu_custom_call.1} parent=47 // pred_check_branch
          %995 = sbr.rel (%p993) target = $region52
        $region51: #{tpu_custom_call.1} parent=47 // pred_region
          %s996 = smul.u32 32, %s21
          %998 = vsyncadd %s989, 0
          %s999 = smul.addr %s996, 8
          %s1000 = scalar_lea.hbm %s7, %s999
          %s1001 = sshll.u32 %s992, 4
          %s1002 = int_to_ptr.vmem [resolvable:$true] %s1001
          %s1003 = sshll.u32 %s1000, 4
          %s1004 = int_to_ptr.hbm [resolvable:$true] %s1003
          %1009 = dma.vmem_to_hbm [thread:$0]  %s1002, 4096, %s1004, %s989, 128, 128, 8
        $region52: #{tpu_custom_call.1} parent=47 // pred_fallthru
          _
      $region48: #{tpu_custom_call.1} parent=5 // pred_fallthru
        _
      %p1010 = scmp.le.s32.totalorder 2, %s16
      // Predicated region
      $region53: #{tpu_custom_call.1} parent=5 // pred_check
        %p1011 = pneg %p1010
      $region54: #{tpu_custom_call.1} parent=5 // pred_check_branch
        %1013 = sbr.rel (%p1011) target = $region56
      $region55: #{tpu_custom_call.1} parent=5 // pred_region
        %s1014 = ssub.s32 %s16, 2
        // Predicated region
        $region57: #{tpu_custom_call.1} parent=55 // pred_check
          %p1015 = pneg %p197
        $region58: #{tpu_custom_call.1} parent=55 // pred_check_branch
          %1017 = sbr.rel (%p1015) target = $region60
        $region59: #{tpu_custom_call.1} parent=55 // pred_region
          %s1018 = sand.u32 %s182, 1
          %s1019 = scalar_lea.sflag [#allocation3], %s1018
          %s1020 = sand.u32 %s182, 1
          %s1021 = smul.addr %s1020, 256
          %s1022 = scalar_lea.vmem [#allocation2], %s1021
          %1024 = dma.done %s1019, 4096
        $region60: #{tpu_custom_call.1} parent=55 // pred_fallthru
          _
      $region56: #{tpu_custom_call.1} parent=5 // pred_fallthru
        _
    $region6: #{tpu_custom_call.1} parent=1 // loop_footer
      %s20 = sadd.s32 1, %s16
    $region7: #{tpu_custom_call.1} parent=1 // loop_footer_branch
      %15 = sbr.rel target = $region3
    $region8: #{tpu_custom_call.1} parent=1 // loop_exit
      _
    %1025 = vsyncpa [#allocation3], 1
    %s1026 = scalar_lea.sflag [#allocation3], 1
    %1027 = vsyncpa %s1026, 1

</llo_original>
